<compile_context>
chip_gen: v7x
topology: tpu7x:2x2x1
jax: 0.10.0
libtpu: 0.0.40
codegen_flags: <defaults>
</compile_context>

<pallas_src>
import functools

import jax
import jax.numpy as jnp
from jax.experimental import pallas as pl
from jax.experimental.pallas import tpu as pltpu


# ---------------------------------------------------------------------------
# Helpers
# ---------------------------------------------------------------------------
def _round_up(x, m):
    return ((x + m - 1) // m) * m


def _pick_moe_chunk(moe_dim, target=512):
    """Largest moe_dim chunk <= target that is a multiple of 128 and divides
    moe_dim; falls back to a single full-width chunk."""
    if moe_dim <= target:
        return moe_dim
    for mc in range(target, 127, -128):
        if moe_dim % mc == 0:
            return mc
    # TODO(synk): pad moe_dim for awkward sizes instead of one giant chunk.
    return moe_dim


def _vmem_capacity_bytes():
    try:
        return int(pltpu.get_tpu_info().vmem_capacity_bytes)
    except Exception:
        return 64 * 2 ** 20   # conservative (v7x-sized) fallback


# ---------------------------------------------------------------------------
# Kernel
# ---------------------------------------------------------------------------
def _grouped_moe_kernel(tile_expert_ref, tile_valid_ref,       # scalar prefetch
                        x_ref, gw_ref, uw_ref, dw_ref, w_ref,  # inputs
                        o_ref,                                 # output
                        acc_ref):                              # scratch
    """grid = (slot_tiles, moe_dim_chunks); chunk axis accumulates into acc."""
    t = pl.program_id(0)
    c = pl.program_id(1)

    @pl.when(c == 0)
    def _():
        acc_ref[...] = jnp.zeros_like(acc_ref)

    # Skip tiles past the last routed assignment (group padding).
    @pl.when(tile_valid_ref[t] != 0)
    def _():
        x = x_ref[...]                                   # (tm, dim)
        g = jnp.dot(x, gw_ref[0], preferred_element_type=jnp.float32)
        u = jnp.dot(x, uw_ref[0], preferred_element_type=jnp.float32)
        h = (g * jax.nn.sigmoid(g)) * u                  # SiLU(gate) * up, f32
        # Fold the combine weight before the down matmul and feed the MXU in the
        # input dtype (bf16 in production) -> full MXU rate, f32 accumulation.
        h = (w_ref[...] * h).astype(x.dtype)             # (tm, mc)
        acc_ref[...] += jnp.dot(h, dw_ref[0], preferred_element_type=jnp.float32)

    @pl.when(c == pl.num_programs(1) - 1)
    def _():
        o_ref[...] = acc_ref[...].astype(o_ref.dtype)


# ---------------------------------------------------------------------------
# Grouped expert dispatch + Pallas call
# ---------------------------------------------------------------------------
def moe_experts_grouped(x_flat, gate_wT, up_wT, down_wT, topk_weight,
                        topk_indices, *, token_tile=512, moe_chunk=None):
    """x_flat: (T, dim); *_wT: (E, dim, moe_dim)/(E, moe_dim, dim);
    topk_weight/topk_indices: (T, k). Returns (T, dim) combined output."""
    T, dim = x_flat.shape
    E, _, moe_dim = gate_wT.shape
    k = topk_indices.shape[-1]
    A = T * k                                             # total assignments

    # Token-tile size: multiple of the dtype sublane packing (f32->8, bf16->16).
    sub = 8 * max(1, 4 // jnp.dtype(x_flat.dtype).itemsize)
    tm = _round_up(max(sub, min(token_tile, _round_up(A, sub))), sub)
    # Static upper bound on used tiles: sum_e ceil(c_e/tm) <= A//tm + E.
    num_tiles = A // tm + E
    s_max = num_tiles * tm

    mc = moe_chunk if moe_chunk is not None else _pick_moe_chunk(moe_dim)
    assert moe_dim % mc == 0 and (mc == moe_dim or mc % 128 == 0)
    nc = moe_dim // mc

    # --- routing metadata: sort assignments by expert, pad groups to tm -------
    expert_flat = topk_indices.reshape(A).astype(jnp.int32)
    w_flat = topk_weight.reshape(A).astype(jnp.float32)
    tok_flat = jnp.arange(A, dtype=jnp.int32) // k

    order = jnp.argsort(expert_flat)                      # (A,)
    sorted_expert = expert_flat[order]
    sorted_tok = tok_flat[order]
    sorted_w = w_flat[order]

    counts = jnp.zeros((E,), jnp.int32).at[expert_flat].add(1)
    group_start = jnp.concatenate(
        [jnp.zeros((1,), jnp.int32), jnp.cumsum(counts)[:-1]])
    padded_counts = ((counts + tm - 1) // tm) * tm
    padded_offsets = jnp.concatenate(
        [jnp.zeros((1,), jnp.int32), jnp.cumsum(padded_counts)[:-1]])

    i_idx = jnp.arange(A, dtype=jnp.int32)
    dest = padded_offsets[sorted_expert] + (i_idx - group_start[sorted_expert])

    slot_tok = jnp.zeros((s_max,), jnp.int32).at[dest].set(sorted_tok)
    slot_w = jnp.zeros((s_max,), jnp.float32).at[dest].set(sorted_w)
    assign_slot = jnp.zeros((A,), jnp.int32).at[order].set(dest)

    # Per-tile expert id + validity (1-D SMEM via scalar prefetch: no lane pad).
    tile_counts = padded_counts // tm
    tiles_cum = jnp.cumsum(tile_counts)
    total_used = tiles_cum[-1]
    tile_idx = jnp.arange(num_tiles, dtype=jnp.int32)
    raw_e = jnp.minimum(
        jnp.searchsorted(tiles_cum, tile_idx, side="right"), E - 1
    ).astype(jnp.int32)
    last_used_e = raw_e[jnp.maximum(total_used - 1, 0)]
    tile_valid = (tile_idx < total_used).astype(jnp.int32)
    # Unused tail tiles keep the last expert index -> their weight DMA is elided.
    tile_expert = jnp.where(tile_valid != 0, raw_e, last_used_e).astype(jnp.int32)

    # Pre-gather tokens into the grouped layout (activation permutation left to
    # XLA; the heavy expert GEMMs run in the Pallas kernel below).
    x_sorted = x_flat[slot_tok]                           # (s_max, dim)
    slot_w2 = slot_w[:, None]                             # (s_max, 1) f32

    # --- generation-aware VMEM budget -----------------------------------------
    in_b = jnp.dtype(x_flat.dtype).itemsize
    w_b = jnp.dtype(gate_wT.dtype).itemsize
    est = (2 * tm * dim * in_b            # x tile (double-buffered)
           + 2 * 3 * dim * mc * w_b       # gate/up/down weight chunks
           + 2 * tm * 128 * 4             # per-slot combine weights (lane pad)
           + 2 * tm * dim * in_b          # output tile
           + tm * dim * 4                 # f32 accumulator scratch
           + 3 * tm * mc * 4)             # f32 g / u / h temporaries
    vmem_limit = int(min(max(2 * est, 32 * 2 ** 20),
                         int(0.85 * _vmem_capacity_bytes())))

    grid_spec = pltpu.PrefetchScalarGridSpec(
        num_scalar_prefetch=2,
        grid=(num_tiles, nc),
        in_specs=[
            pl.BlockSpec((tm, dim), lambda t, c, te, tv: (t, 0)),      # x_sorted
            pl.BlockSpec((1, dim, mc), lambda t, c, te, tv: (te[t], 0, c)),  # gate
            pl.BlockSpec((1, dim, mc), lambda t, c, te, tv: (te[t], 0, c)),  # up
            pl.BlockSpec((1, mc, dim), lambda t, c, te, tv: (te[t], c, 0)),  # down
            pl.BlockSpec((tm, 1), lambda t, c, te, tv: (t, 0)),        # combine w
        ],
        out_specs=pl.BlockSpec((tm, dim), lambda t, c, te, tv: (t, 0)),
        scratch_shapes=[pltpu.VMEM((tm, dim), jnp.float32)],
    )

    out_sorted = pl.pallas_call(
        _grouped_moe_kernel,
        out_shape=jax.ShapeDtypeStruct((s_max, dim), x_flat.dtype),
        grid_spec=grid_spec,
        compiler_params=pltpu.CompilerParams(
            # Slot tiles are independent (v7x megacore splits them contiguously,
            # so per-expert weight re-use is preserved within each core); the
            # moe_dim-chunk axis is a reduction into the resident accumulator.
            dimension_semantics=("parallel", "arbitrary"),
            vmem_limit_bytes=vmem_limit,
        ),
    )(tile_expert, tile_valid, x_sorted, gate_wT, up_wT, down_wT, slot_w2)

    # Combine the k expert outputs per token (combine weights already folded
    # inside the kernel); gather + f32 sum left to XLA.
    y = out_sorted[assign_slot].astype(jnp.float32).reshape(T, k, dim).sum(axis=1)
    return y.astype(x_flat.dtype)


# ---------------------------------------------------------------------------
# Full forward (gate + grouped experts)
# ---------------------------------------------------------------------------
@functools.partial(jax.jit,
                   static_argnames=("num_experts_per_tok", "aux_loss_alpha",
                                    "token_tile", "moe_chunk"))
def deepseek_moe_forward(x, params, num_experts_per_tok, aux_loss_alpha=0.001,
                         token_tile=512, moe_chunk=None):
    bsz, seq_len, dim = x.shape
    T = bsz * seq_len
    E = params["gate_weight_T"].shape[1]
    k = num_experts_per_tok

    x_flat = x.reshape(T, dim)

    # --- MoEGate: tiny GEMM, f32 accumulation so routing is stable in bf16 ---
    logits = jnp.dot(x_flat, params["gate_weight_T"],
                     preferred_element_type=jnp.float32)
    scores = jax.nn.softmax(logits, axis=-1)                     # (T, E) f32
    topk_weight, topk_indices = jax.lax.top_k(scores, k)         # (T, k)

    # Aux-loss bookkeeping (AddAuxiliaryLoss is identity in forward; computed
    # for parity with the module and DCE'd under jit since unused).
    scores_b = scores.reshape(bsz, seq_len, E)
    idx_aux = topk_indices.reshape(bsz, seq_len * k)
    ce = jnp.zeros((bsz, E), jnp.float32)
    ce = ce.at[jnp.arange(bsz)[:, None], idx_aux].add(1.0)
    ce = ce / (seq_len * k / E)
    aux_loss = jnp.mean(jnp.sum(ce * scores_b.mean(axis=1), axis=1)) * aux_loss_alpha
    del aux_loss

    y = moe_experts_grouped(x_flat, params["gate_wT"], params["up_wT"],
                            params["down_wT"], topk_weight, topk_indices,
                            token_tile=token_tile, moe_chunk=moe_chunk)
    return y.reshape(bsz, seq_len, dim)


# ---------------------------------------------------------------------------
# Reference (plain JAX, f32) for correctness checks
# ---------------------------------------------------------------------------
def reference_experts(xf, params, comb):
    """xf: (T, dim) f32; comb: (T, E) dense combine weights."""
    E = params["gate_wT"].shape[0]
    y = jnp.zeros_like(xf)
    for e in range(E):
        g = xf @ params["gate_wT"][e].astype(jnp.float32)
        u = xf @ params["up_wT"][e].astype(jnp.float32)
        h = (g * jax.nn.sigmoid(g)) * u
        y = y + comb[:, e:e + 1] * (h @ params["down_wT"][e].astype(jnp.float32))
    return y


def reference_forward(x, params, k):
    bsz, seq_len, dim = x.shape
    T = bsz * seq_len
    E = params["gate_weight_T"].shape[1]
    xf = x.reshape(T, dim).astype(jnp.float32)
    logits = xf @ params["gate_weight_T"].astype(jnp.float32)
    scores = jax.nn.softmax(logits, axis=-1)
    tw, ti = jax.lax.top_k(scores, k)
    comb = jnp.zeros((T, E), jnp.float32)
    comb = comb.at[jnp.arange(T)[:, None], ti].add(tw)
    return reference_experts(xf, params, comb).reshape(bsz, seq_len, dim), tw, ti


# ---------------------------------------------------------------------------
if __name__ == "__main__":
    # Small shapes consistent with the module.
    bsz, seq_len, dim = 2, 8, 32
    moe_dim = 64
    num_experts = 8
    num_experts_per_tok = 2

    key = jax.random.PRNGKey(0)
    k_x, k_gw, k_g, k_u, k_d = jax.random.split(key, 5)

    x = jax.random.normal(k_x, (bsz, seq_len, dim), jnp.float32)
    params = {
        # MoEGate.weight: Linear(dim -> E), stored pre-transposed as (dim, E)
        "gate_weight_T": 0.1 * jax.random.normal(k_gw, (dim, num_experts), jnp.float32),
        # Experts' gate_proj / up_proj: Linear(dim -> moe_dim) -> (E, dim, moe_dim)
        "gate_wT": 0.1 * jax.random.normal(k_g, (num_experts, dim, moe_dim), jnp.float32),
        "up_wT": 0.1 * jax.random.normal(k_u, (num_experts, dim, moe_dim), jnp.float32),
        # Experts' down_proj: Linear(moe_dim -> dim) -> (E, moe_dim, dim)
        "down_wT": 0.1 * jax.random.normal(k_d, (num_experts, moe_dim, dim), jnp.float32),
    }

    y_ref, tw_ref, ti_ref = reference_forward(x, params, num_experts_per_tok)

    # f32 full-forward check (token_tile=8 -> several slot tiles: exercises the
    # grouped layout, group padding, tile-validity skip and the chunk loop).
    y = deepseek_moe_forward(x, params, num_experts_per_tok, token_tile=8)
    y = jax.block_until_ready(y)
    assert y.shape == (bsz, seq_len, dim)
    err = float(jnp.max(jnp.abs(y - y_ref)) / (jnp.max(jnp.abs(y_ref)) + 1e-12))
    assert err < 2e-2, f"f32 mismatch vs reference: rel err {err}"

    # bf16 expert-path check with identical routing (isolates kernel numerics
    # from any bf16-induced top-k flips).
    T = bsz * seq_len
    comb_ref = jnp.zeros((T, num_experts), jnp.float32)
    comb_ref = comb_ref.at[jnp.arange(T)[:, None], ti_ref].add(tw_ref)
    y_ref_exp = reference_experts(x.reshape(T, dim).astype(jnp.float32), params, comb_ref)
    params16 = {kn: v.astype(jnp.bfloat16) for kn, v in params.items()}
    y16_exp = moe_experts_grouped(
        x.reshape(T, dim).astype(jnp.bfloat16),
        params16["gate_wT"], params16["up_wT"], params16["down_wT"],
        tw_ref, ti_ref, token_tile=8)
    y16_exp = jax.block_until_ready(y16_exp)
    err16 = float(jnp.max(jnp.abs(y16_exp.astype(jnp.float32) - y_ref_exp))
                  / (jnp.max(jnp.abs(y_ref_exp)) + 1e-12))
    assert err16 < 0.1, f"bf16 expert-path mismatch vs reference: rel err {err16}"

    # bf16 full forward: compile/run + shape/dtype/finiteness sanity.
    y16 = deepseek_moe_forward(x.astype(jnp.bfloat16), params16,
                               num_experts_per_tok, token_tile=8)
    y16 = jax.block_until_ready(y16)
    assert y16.shape == (bsz, seq_len, dim) and y16.dtype == jnp.bfloat16
    assert bool(jnp.all(jnp.isfinite(y16.astype(jnp.float32))))

    print("KERNEL_OK")
</pallas_src>

<mosaic_0001>
module attributes {stable_mosaic.version = 11 : i64} {
  func.func private @main(%arg0: i32) attributes {dimension_semantics = [#tpu.dimension_semantics<core_parallel>], iteration_bounds = array<i64: 2>, tpu.core_type = #tpu.core_type<sc_scalar_subcore>, window_params = []} {
    return
  }
}

module attributes {stable_mosaic.version = 11 : i64} {
  func.func private @main(%arg0: i32) attributes {dimension_semantics = [#tpu.dimension_semantics<core_parallel>], iteration_bounds = array<i64: 2>, tpu.core_type = #tpu.core_type<sc_scalar_subcore>, window_params = []} {
    return
  }
}

module attributes {stable_mosaic.version = 11 : i64} {
  func.func @_grouped_moe_kernel(%arg0: i32, %arg1: i32, %arg2: memref<12xi32, #tpu.memory_space<smem>>, %arg3: memref<12xi32, #tpu.memory_space<smem>>, %arg4: memref<8x32xf32, #tpu.memory_space<vmem>>, %arg5: memref<1x32x64xf32, #tpu.memory_space<vmem>>, %arg6: memref<1x32x64xf32, #tpu.memory_space<vmem>>, %arg7: memref<1x64x32xf32, #tpu.memory_space<vmem>>, %arg8: memref<8x1xf32, #tpu.memory_space<vmem>>, %arg9: memref<8x32xf32, #tpu.memory_space<vmem>>, %arg10: memref<8x32xf32, #tpu.memory_space<vmem>>) attributes {dimension_semantics = [#tpu.dimension_semantics<parallel>, #tpu.dimension_semantics<arbitrary>], iteration_bounds = array<i64: 12, 1>, scalar_prefetch = 2 : i64, scratch_operands = 1 : i64, tpu.core_type = #tpu.core_type<tc>, window_params = [{transform_indices = @transform_0, window_bounds = array<i64: 8, 32>}, {transform_indices = @transform_1, window_bounds = array<i64: 1, 32, 64>}, {transform_indices = @transform_2, window_bounds = array<i64: 1, 32, 64>}, {transform_indices = @transform_3, window_bounds = array<i64: 1, 64, 32>}, {transform_indices = @transform_4, window_bounds = array<i64: 8, 1>}, {transform_indices = @transform_5, window_bounds = array<i64: 8, 32>}]} {
    %c0_i32 = arith.constant 0 : i32
    %0 = arith.cmpi eq, %arg1, %c0_i32 : i32
    %1 = arith.extui %0 : i1 to i32
    %c0_i32_0 = arith.constant 0 : i32
    %2 = arith.cmpi ne, %1, %c0_i32_0 : i32
    scf.if %2 {
      %cst = arith.constant 0.000000e+00 : f32
      %11 = vector.broadcast %cst : f32 to vector<8x32xf32>
      %c0 = arith.constant 0 : index
      %c0_5 = arith.constant 0 : index
      %12 = vector.load %arg10[%c0, %c0_5] : memref<8x32xf32, #tpu.memory_space<vmem>>, vector<8x32xf32>
      tpu.vector_store %arg10[%c0, %c0_5], %11 {strides = array<i32>} : memref<8x32xf32, #tpu.memory_space<vmem>>, vector<8x32xf32>,
    } else {
    }
    %3 = arith.index_cast %arg0 : i32 to index
    %4 = memref.load %arg3[%3] : memref<12xi32, #tpu.memory_space<smem>>
    %c0_i32_1 = arith.constant 0 : i32
    %5 = arith.cmpi ne, %4, %c0_i32_1 : i32
    %6 = arith.extui %5 : i1 to i32
    %c0_i32_2 = arith.constant 0 : i32
    %7 = arith.cmpi ne, %6, %c0_i32_2 : i32
    scf.if %7 {
      %c0 = arith.constant 0 : index
      %c0_5 = arith.constant 0 : index
      %11 = vector.load %arg4[%c0, %c0_5] : memref<8x32xf32, #tpu.memory_space<vmem>>, vector<8x32xf32>
      %c0_6 = arith.constant 0 : index
      %c0_7 = arith.constant 0 : index
      %c0_8 = arith.constant 0 : index
      %12 = vector.load %arg5[%c0_6, %c0_7, %c0_8] : memref<1x32x64xf32, #tpu.memory_space<vmem>>, vector<1x32x64xf32>
      %13 = vector.shape_cast %12 : vector<1x32x64xf32> to vector<32x64xf32>
      %cst = arith.constant dense<0.000000e+00> : vector<8x64xf32>
      %14 = tpu.matmul %11, %13, %cst {dimension_numbers = #tpu.dot_dimension_numbers<[1], [0], [0], [1], [0, 0, 1, 1], [], []>} : vector<8x32xf32>, vector<32x64xf32>, vector<8x64xf32> -> vector<8x64xf32>
      %c0_9 = arith.constant 0 : index
      %c0_10 = arith.constant 0 : index
      %c0_11 = arith.constant 0 : index
      %15 = vector.load %arg6[%c0_9, %c0_10, %c0_11] : memref<1x32x64xf32, #tpu.memory_space<vmem>>, vector<1x32x64xf32>
      %16 = vector.shape_cast %15 : vector<1x32x64xf32> to vector<32x64xf32>
      %cst_12 = arith.constant dense<0.000000e+00> : vector<8x64xf32>
      %17 = tpu.matmul %11, %16, %cst_12 {dimension_numbers = #tpu.dot_dimension_numbers<[1], [0], [0], [1], [0, 0, 1, 1], [], []>} : vector<8x32xf32>, vector<32x64xf32>, vector<8x64xf32> -> vector<8x64xf32>
      %18 = arith.negf %14 : vector<8x64xf32>
      %19 = math.exp %18 : vector<8x64xf32>
      %cst_13 = arith.constant 1.000000e+00 : f32
      %20 = vector.broadcast %cst_13 : f32 to vector<8x64xf32>
      %21 = arith.addf %20, %19 : vector<8x64xf32>
      %22 = arith.divf %20, %21 : vector<8x64xf32>
      %23 = arith.mulf %14, %22 : vector<8x64xf32>
      %24 = arith.mulf %23, %17 : vector<8x64xf32>
      %c0_14 = arith.constant 0 : index
      %c0_15 = arith.constant 0 : index
      %25 = vector.load %arg8[%c0_14, %c0_15] : memref<8x1xf32, #tpu.memory_space<vmem>>, vector<8x1xf32>
      %26 = vector.broadcast %25 : vector<8x1xf32> to vector<8x64xf32>
      %27 = arith.mulf %26, %24 : vector<8x64xf32>
      %c0_16 = arith.constant 0 : index
      %c0_17 = arith.constant 0 : index
      %28 = vector.load %arg10[%c0_16, %c0_17] : memref<8x32xf32, #tpu.memory_space<vmem>>, vector<8x32xf32>
      %c0_18 = arith.constant 0 : index
      %c0_19 = arith.constant 0 : index
      %c0_20 = arith.constant 0 : index
      %29 = vector.load %arg7[%c0_18, %c0_19, %c0_20] : memref<1x64x32xf32, #tpu.memory_space<vmem>>, vector<1x64x32xf32>
      %30 = vector.shape_cast %29 : vector<1x64x32xf32> to vector<64x32xf32>
      %cst_21 = arith.constant dense<0.000000e+00> : vector<8x32xf32>
      %31 = tpu.matmul %27, %30, %cst_21 {dimension_numbers = #tpu.dot_dimension_numbers<[1], [0], [0], [1], [0, 0, 1, 1], [], []>} : vector<8x64xf32>, vector<64x32xf32>, vector<8x32xf32> -> vector<8x32xf32>
      %32 = arith.addf %28, %31 : vector<8x32xf32>
      %c0_22 = arith.constant 0 : index
      %c0_23 = arith.constant 0 : index
      %33 = vector.load %arg10[%c0_22, %c0_23] : memref<8x32xf32, #tpu.memory_space<vmem>>, vector<8x32xf32>
      tpu.vector_store %arg10[%c0_22, %c0_23], %32 {strides = array<i32>} : memref<8x32xf32, #tpu.memory_space<vmem>>, vector<8x32xf32>,
    } else {
    }
    %c0_i32_3 = arith.constant 0 : i32
    %8 = arith.cmpi eq, %arg1, %c0_i32_3 : i32
    %9 = arith.extui %8 : i1 to i32
    %c0_i32_4 = arith.constant 0 : i32
    %10 = arith.cmpi ne, %9, %c0_i32_4 : i32
    scf.if %10 {
      %c0 = arith.constant 0 : index
      %c0_5 = arith.constant 0 : index
      %11 = vector.load %arg10[%c0, %c0_5] : memref<8x32xf32, #tpu.memory_space<vmem>>, vector<8x32xf32>
      %c0_6 = arith.constant 0 : index
      %c0_7 = arith.constant 0 : index
      %12 = vector.load %arg9[%c0_6, %c0_7] : memref<8x32xf32, #tpu.memory_space<vmem>>, vector<8x32xf32>
      tpu.vector_store %arg9[%c0_6, %c0_7], %11 {strides = array<i32>} : memref<8x32xf32, #tpu.memory_space<vmem>>, vector<8x32xf32>,
    } else {
    }
    return
  }
  func.func @transform_0(%arg0: i32, %arg1: i32, %arg2: memref<12xi32, #tpu.memory_space<smem>>, %arg3: memref<12xi32, #tpu.memory_space<smem>>) -> (i32, i32) {
    %c0_i32 = arith.constant 0 : i32
    %c0_i32_0 = arith.constant 0 : i32
    return %arg0, %c0_i32 : i32, i32
  }
  func.func @transform_1(%arg0: i32, %arg1: i32, %arg2: memref<12xi32, #tpu.memory_space<smem>>, %arg3: memref<12xi32, #tpu.memory_space<smem>>) -> (i32, i32, i32) {
    %0 = arith.index_cast %arg0 : i32 to index
    %1 = memref.load %arg2[%0] : memref<12xi32, #tpu.memory_space<smem>>
    %c0_i32 = arith.constant 0 : i32
    %c0_i32_0 = arith.constant 0 : i32
    return %1, %c0_i32, %arg1 : i32, i32, i32
  }
  func.func @transform_2(%arg0: i32, %arg1: i32, %arg2: memref<12xi32, #tpu.memory_space<smem>>, %arg3: memref<12xi32, #tpu.memory_space<smem>>) -> (i32, i32, i32) {
    %0 = arith.index_cast %arg0 : i32 to index
    %1 = memref.load %arg2[%0] : memref<12xi32, #tpu.memory_space<smem>>
    %c0_i32 = arith.constant 0 : i32
    %c0_i32_0 = arith.constant 0 : i32
    return %1, %c0_i32, %arg1 : i32, i32, i32
  }
  func.func @transform_3(%arg0: i32, %arg1: i32, %arg2: memref<12xi32, #tpu.memory_space<smem>>, %arg3: memref<12xi32, #tpu.memory_space<smem>>) -> (i32, i32, i32) {
    %0 = arith.index_cast %arg0 : i32 to index
    %1 = memref.load %arg2[%0] : memref<12xi32, #tpu.memory_space<smem>>
    %c0_i32 = arith.constant 0 : i32
    %c0_i32_0 = arith.constant 0 : i32
    return %1, %arg1, %c0_i32 : i32, i32, i32
  }
  func.func @transform_4(%arg0: i32, %arg1: i32, %arg2: memref<12xi32, #tpu.memory_space<smem>>, %arg3: memref<12xi32, #tpu.memory_space<smem>>) -> (i32, i32) {
    %c0_i32 = arith.constant 0 : i32
    %c0_i32_0 = arith.constant 0 : i32
    return %arg0, %c0_i32 : i32, i32
  }
  func.func @transform_5(%arg0: i32, %arg1: i32, %arg2: memref<12xi32, #tpu.memory_space<smem>>, %arg3: memref<12xi32, #tpu.memory_space<smem>>) -> (i32, i32) {
    %c0_i32 = arith.constant 0 : i32
    %c0_i32_0 = arith.constant 0 : i32
    return %arg0, %c0_i32 : i32, i32
  }
}

</mosaic_0001>

<llo_original>
// kernel: custom-call
$region0: #{custom-call}
  %s0 = inlined_call_operand.vmem [shape: u32[12], index: 0, kind: output, shape index: {}]

// kernel: deepseek_moe_forward.1
$region0: #{deepseek_moe_forward.1}
  #allocation0 [shape = 'u32[]', space=smem, size = 0x4, offset = 0x4, fixed_abs, tag = 'smem constant byte address 0x4 - core index']
  #allocation1 [shape = 'u32[144,128]{1,0:T(1,128)}', space=vmem, size = 0x12000, scoped, tag = 'internal scratch']
  #allocation2 [shape = 'f32[8,32]{1,0:T(8,128)}', space=vmem, size = 0x1000, scoped, tag = 'scratch operand']
  #allocation3 [shape = 's32[1]{0}', space=sflag, size = 0x4, scoped, tag = 'scoped memory for deepseek_moe_forward.1']
  #allocation4 [shape = 'u8[512]{0}', space=smem, size = 0x200, scoped, tag = 'prefetched SMEM operand 0']
  #allocation5 [shape = 'u8[512]{0}', space=smem, size = 0x200, scoped, tag = 'prefetched SMEM operand 1']
  %s0 = inlined_call_operand.vmem [shape: s32[12], index: 0, kind: input, shape index: {}]
  %s1 = inlined_call_operand.vmem [shape: s32[12], index: 1, kind: input, shape index: {}]
  %s2 = inlined_call_operand.vmem [shape: f32[96,32], index: 2, kind: input, shape index: {}]
  %s3 = inlined_call_operand.vmem [shape: f32[8,32,64], index: 3, kind: input, shape index: {}]
  %s4 = inlined_call_operand.vmem [shape: f32[8,32,64], index: 4, kind: input, shape index: {}]
  %s5 = inlined_call_operand.vmem [shape: f32[8,64,32], index: 5, kind: input, shape index: {}]
  %s6 = inlined_call_operand.vmem [shape: f32[96,1], index: 6, kind: input, shape index: {}]
  %s7 = inlined_call_operand.vmem [shape: f32[96,32], index: 7, kind: output, shape index: {}]
  %s8 = sld [smem:[#allocation0]]
  $region65: #{deepseek_moe_forward.1} parent=0
    _
  %s10 = ssub.s32 1, %s8
  %s11 = scalar_select 0, %s10, %s8
  %s12 = sshll.u32 %s0, 4
  %s13 = int_to_ptr.vmem [resolvable:$true] %s12
  %15 = dma.vmem_to_smem %s13, 16, [#allocation4], [#allocation3]
  %s16 = sshll.u32 %s1, 4
  %s17 = int_to_ptr.vmem [resolvable:$true] %s16
  %19 = dma.vmem_to_smem %s17, 16, [#allocation5], [#allocation3]
  %20 = dma.done [#allocation3], 32
  %21 = sfence
  loop: start=0, step=1, limit=14
  $region2: #{deepseek_moe_forward.1} parent=0 // loop_pre_header
    _
  $region3: #{deepseek_moe_forward.1} parent=0 // loop_header
    %s23 = sphi 0, %s27
    %p24 = scmp.ge.s32.totalorder %s23, 14
    %s30 = sphi 0, %s42
    %s31 = sphi 0, %s38
    %s32 = sphi 0, %s30
    %s33 = sphi 0, %s31
    %s34 = sphi 0, %s32
    %s35 = sphi 0, %s33
    %s45 = sphi 0, %s47
    %s48 = sphi 0, %s45
    %s49 = sphi 0, %s48
    %s65 = sphi 0, %s49
    %s75 = sphi 0, %s77
    %s78 = sphi 0, %s75
    %s79 = sphi 0, %s78
    %s95 = sphi 0, %s79
    %s105 = sphi 0, %s107
    %s108 = sphi 0, %s105
    %s109 = sphi 0, %s108
    %s125 = sphi 0, %s109
    %s135 = sphi 0, %s137
    %s138 = sphi 0, %s135
    %s139 = sphi 0, %s138
    %s155 = sphi 0, %s139
    %s161 = sphi 0, %s163
    %s164 = sphi 0, %s161
    %s165 = sphi 0, %s164
    %s181 = sphi 0, %s165
    %s187 = sphi 0, %s189
    %s190 = sphi 0, %s187
    %s191 = sphi 0, %s190
    %s207 = sphi 0, %s191
  $region4: #{deepseek_moe_forward.1} parent=0 // loop_header_branch
    %26 = sbr.rel (%p24) target = $region8
  $region5: #{deepseek_moe_forward.1} parent=0 // loop_body
    %s28 = ssub.s32 %s23, 1
    %s29 = ssub.s32 %s23, 2
    %s36 = sadd.s32 1, %s31
    %p37 = scmp.ge.s32.totalorder %s36, 1
    %s38 = scalar_select %p37, 0, %s36
    %s39 = sadd.s32 1, %s30
    %s40 = scalar_select %p37, %s39, %s30
    %p41 = scmp.ge.s32.totalorder %s40, 12
    %s42 = scalar_select %p41, 0, %s40
    %s43 = ssub.s32 %s30, %s42
    %p44 = scmp.eq.s32.totalorder %s43, 0
    %s46 = sadd.s32 %s45, 1
    %s47 = scalar_select %p44, %s45, %s46
    %p50 = pneg %p44
    %p51 = scmp.eq.s32.totalorder %s23, 11
    %p52 = por %p50, %p51
    %p53 = scmp.ne.s32.totalorder %s45, %s48
    %p54 = scmp.eq.s32.totalorder %s23, 0
    %p55 = por %p53, %p54
    %p56 = scmp.ne.s32.totalorder %s45, %s48
    %p57 = scmp.eq.s32.totalorder %s28, 11
    %p58 = por %p56, %p57
    %p59 = scmp.ne.s32.totalorder %s48, %s49
    %p60 = scmp.eq.s32.totalorder %s28, 0
    %p61 = por %p59, %p60
    %p62 = scmp.ne.s32.totalorder %s48, %s49
    %p63 = scmp.eq.s32.totalorder %s29, 11
    %p64 = por %p62, %p63
    %p66 = scmp.ne.s32.totalorder %s49, %s65
    %p67 = scmp.eq.s32.totalorder %s29, 0
    %p68 = por %p66, %p67
    %s69 = sld [smem:[#allocation4 + %s30]]
    %s70 = sld [smem:[#allocation4 + %s42]]
    %s71 = ssub.s32 %s69, %s70
    %s72 = ssub.s32 %s31, %s38
    %s73 = sor.u32 %s71, %s72
    %p74 = scmp.eq.s32.totalorder %s73, 0
    %s76 = sadd.s32 %s75, 1
    %s77 = scalar_select %p74, %s75, %s76
    %p80 = pneg %p74
    %p81 = scmp.eq.s32.totalorder %s23, 11
    %p82 = por %p80, %p81
    %p83 = scmp.ne.s32.totalorder %s75, %s78
    %p84 = scmp.eq.s32.totalorder %s23, 0
    %p85 = por %p83, %p84
    %p86 = scmp.ne.s32.totalorder %s75, %s78
    %p87 = scmp.eq.s32.totalorder %s28, 11
    %p88 = por %p86, %p87
    %p89 = scmp.ne.s32.totalorder %s78, %s79
    %p90 = scmp.eq.s32.totalorder %s28, 0
    %p91 = por %p89, %p90
    %p92 = scmp.ne.s32.totalorder %s78, %s79
    %p93 = scmp.eq.s32.totalorder %s29, 11
    %p94 = por %p92, %p93
    %p96 = scmp.ne.s32.totalorder %s79, %s95
    %p97 = scmp.eq.s32.totalorder %s29, 0
    %p98 = por %p96, %p97
    %s99 = sld [smem:[#allocation4 + %s30]]
    %s100 = sld [smem:[#allocation4 + %s42]]
    %s101 = ssub.s32 %s99, %s100
    %s102 = ssub.s32 %s31, %s38
    %s103 = sor.u32 %s101, %s102
    %p104 = scmp.eq.s32.totalorder %s103, 0
    %s106 = sadd.s32 %s105, 1
    %s107 = scalar_select %p104, %s105, %s106
    %p110 = pneg %p104
    %p111 = scmp.eq.s32.totalorder %s23, 11
    %p112 = por %p110, %p111
    %p113 = scmp.ne.s32.totalorder %s105, %s108
    %p114 = scmp.eq.s32.totalorder %s23, 0
    %p115 = por %p113, %p114
    %p116 = scmp.ne.s32.totalorder %s105, %s108
    %p117 = scmp.eq.s32.totalorder %s28, 11
    %p118 = por %p116, %p117
    %p119 = scmp.ne.s32.totalorder %s108, %s109
    %p120 = scmp.eq.s32.totalorder %s28, 0
    %p121 = por %p119, %p120
    %p122 = scmp.ne.s32.totalorder %s108, %s109
    %p123 = scmp.eq.s32.totalorder %s29, 11
    %p124 = por %p122, %p123
    %p126 = scmp.ne.s32.totalorder %s109, %s125
    %p127 = scmp.eq.s32.totalorder %s29, 0
    %p128 = por %p126, %p127
    %s129 = sld [smem:[#allocation4 + %s30]]
    %s130 = sld [smem:[#allocation4 + %s42]]
    %s131 = ssub.s32 %s129, %s130
    %s132 = ssub.s32 %s31, %s38
    %s133 = sor.u32 %s131, %s132
    %p134 = scmp.eq.s32.totalorder %s133, 0
    %s136 = sadd.s32 %s135, 1
    %s137 = scalar_select %p134, %s135, %s136
    %p140 = pneg %p134
    %p141 = scmp.eq.s32.totalorder %s23, 11
    %p142 = por %p140, %p141
    %p143 = scmp.ne.s32.totalorder %s135, %s138
    %p144 = scmp.eq.s32.totalorder %s23, 0
    %p145 = por %p143, %p144
    %p146 = scmp.ne.s32.totalorder %s135, %s138
    %p147 = scmp.eq.s32.totalorder %s28, 11
    %p148 = por %p146, %p147
    %p149 = scmp.ne.s32.totalorder %s138, %s139
    %p150 = scmp.eq.s32.totalorder %s28, 0
    %p151 = por %p149, %p150
    %p152 = scmp.ne.s32.totalorder %s138, %s139
    %p153 = scmp.eq.s32.totalorder %s29, 11
    %p154 = por %p152, %p153
    %p156 = scmp.ne.s32.totalorder %s139, %s155
    %p157 = scmp.eq.s32.totalorder %s29, 0
    %p158 = por %p156, %p157
    %s159 = ssub.s32 %s30, %s42
    %p160 = scmp.eq.s32.totalorder %s159, 0
    %s162 = sadd.s32 %s161, 1
    %s163 = scalar_select %p160, %s161, %s162
    %p166 = pneg %p160
    %p167 = scmp.eq.s32.totalorder %s23, 11
    %p168 = por %p166, %p167
    %p169 = scmp.ne.s32.totalorder %s161, %s164
    %p170 = scmp.eq.s32.totalorder %s23, 0
    %p171 = por %p169, %p170
    %p172 = scmp.ne.s32.totalorder %s161, %s164
    %p173 = scmp.eq.s32.totalorder %s28, 11
    %p174 = por %p172, %p173
    %p175 = scmp.ne.s32.totalorder %s164, %s165
    %p176 = scmp.eq.s32.totalorder %s28, 0
    %p177 = por %p175, %p176
    %p178 = scmp.ne.s32.totalorder %s164, %s165
    %p179 = scmp.eq.s32.totalorder %s29, 11
    %p180 = por %p178, %p179
    %p182 = scmp.ne.s32.totalorder %s165, %s181
    %p183 = scmp.eq.s32.totalorder %s29, 0
    %p184 = por %p182, %p183
    %s185 = ssub.s32 %s30, %s42
    %p186 = scmp.eq.s32.totalorder %s185, 0
    %s188 = sadd.s32 %s187, 1
    %s189 = scalar_select %p186, %s187, %s188
    %p192 = pneg %p186
    %p193 = scmp.eq.s32.totalorder %s23, 11
    %p194 = por %p192, %p193
    %p195 = scmp.ne.s32.totalorder %s187, %s190
    %p196 = scmp.eq.s32.totalorder %s23, 0
    %p197 = por %p195, %p196
    %p198 = scmp.ne.s32.totalorder %s187, %s190
    %p199 = scmp.eq.s32.totalorder %s28, 11
    %p200 = por %p198, %p199
    %p201 = scmp.ne.s32.totalorder %s190, %s191
    %p202 = scmp.eq.s32.totalorder %s28, 0
    %p203 = por %p201, %p202
    %p204 = scmp.ne.s32.totalorder %s190, %s191
    %p205 = scmp.eq.s32.totalorder %s29, 11
    %p206 = por %p204, %p205
    %p208 = scmp.ne.s32.totalorder %s191, %s207
    %p209 = scmp.eq.s32.totalorder %s29, 0
    %p210 = por %p208, %p209
    %p211 = scmp.le.s32.totalorder 1, %s23
    %p212 = scmp.lt.s32.totalorder %s23, 13
    %p213 = pnand %p211, %p212
    %p214 = pneg %p213
    // Predicated region
    $region9: #{deepseek_moe_forward.1} parent=5 // pred_check
      _
    $region10: #{deepseek_moe_forward.1} parent=5 // pred_check_branch
      %216 = sbr.rel (%p213) target = $region12
    $region11: #{deepseek_moe_forward.1} parent=5 // pred_region
      %s217 = ssub.s32 %s23, 1
    $region12: #{deepseek_moe_forward.1} parent=5 // pred_fallthru
      _
    %p218 = scmp.lt.s32.totalorder %s23, 12
    // Predicated region
    $region13: #{deepseek_moe_forward.1} parent=5 // pred_check
      %p219 = pneg %p218
    $region14: #{deepseek_moe_forward.1} parent=5 // pred_check_branch
      %221 = sbr.rel (%p219) target = $region16
    $region15: #{deepseek_moe_forward.1} parent=5 // pred_region
      // Predicated region
      $region17: #{deepseek_moe_forward.1} parent=15 // pred_check
        %p222 = pneg %p55
      $region18: #{deepseek_moe_forward.1} parent=15 // pred_check_branch
        %224 = sbr.rel (%p222) target = $region20
      $region19: #{deepseek_moe_forward.1} parent=15 // pred_region
        %p225 = scmp.lt.s32.totalorder %s30, 11
        %s226 = scalar_select %p225, %s30, 11
        %s227 = smul.addr %s226, 8
        %s228 = scalar_lea.vmem %s2, %s227
      $region20: #{deepseek_moe_forward.1} parent=15 // pred_fallthru
        _
      // Predicated region
      $region21: #{deepseek_moe_forward.1} parent=15 // pred_check
        %p229 = pneg %p85
      $region22: #{deepseek_moe_forward.1} parent=15 // pred_check_branch
        %231 = sbr.rel (%p229) target = $region24
      $region23: #{deepseek_moe_forward.1} parent=15 // pred_region
        %s232 = sld [smem:[#allocation4 + %s30]]
        %p233 = scmp.lt.s32.totalorder %s232, 7
        %s234 = scalar_select %p233, %s232, 7
        %p235 = scmp.lt.s32.totalorder %s31, 0
        %s236 = scalar_select %p235, %s31, 0
        %s237 = smul.addr %s234, 4
        %s238 = sadd.s32 %s236, %s237
        %s239 = smul.addr %s238, 8
        %s240 = scalar_lea.vmem %s3, %s239
        %s241 = sld [smem:[#allocation4 + %s30]]
      $region24: #{deepseek_moe_forward.1} parent=15 // pred_fallthru
        _
      // Predicated region
      $region25: #{deepseek_moe_forward.1} parent=15 // pred_check
        %p242 = pneg %p115
      $region26: #{deepseek_moe_forward.1} parent=15 // pred_check_branch
        %244 = sbr.rel (%p242) target = $region28
      $region27: #{deepseek_moe_forward.1} parent=15 // pred_region
        %s245 = sld [smem:[#allocation4 + %s30]]
        %p246 = scmp.lt.s32.totalorder %s245, 7
        %s247 = scalar_select %p246, %s245, 7
        %p248 = scmp.lt.s32.totalorder %s31, 0
        %s249 = scalar_select %p248, %s31, 0
        %s250 = smul.addr %s247, 4
        %s251 = sadd.s32 %s249, %s250
        %s252 = smul.addr %s251, 8
        %s253 = scalar_lea.vmem %s4, %s252
        %s254 = sld [smem:[#allocation4 + %s30]]
      $region28: #{deepseek_moe_forward.1} parent=15 // pred_fallthru
        _
      // Predicated region
      $region29: #{deepseek_moe_forward.1} parent=15 // pred_check
        %p255 = pneg %p145
      $region30: #{deepseek_moe_forward.1} parent=15 // pred_check_branch
        %257 = sbr.rel (%p255) target = $region32
      $region31: #{deepseek_moe_forward.1} parent=15 // pred_region
        %s258 = sld [smem:[#allocation4 + %s30]]
        %s259 = smul.u32 8, %s31
        %p260 = scmp.lt.s32.totalorder %s258, 7
        %s261 = scalar_select %p260, %s258, 7
        %p262 = scmp.lt.s32.totalorder %s259, 7
        %s263 = scalar_select %p262, %s259, 7
        %s264 = smul.addr %s261, 8
        %s265 = sadd.s32 %s263, %s264
        %s266 = smul.addr %s265, 8
        %s267 = scalar_lea.vmem %s5, %s266
        %s268 = sld [smem:[#allocation4 + %s30]]
        %s269 = smul.u32 8, %s31
      $region32: #{deepseek_moe_forward.1} parent=15 // pred_fallthru
        _
      // Predicated region
      $region33: #{deepseek_moe_forward.1} parent=15 // pred_check
        %p270 = pneg %p171
      $region34: #{deepseek_moe_forward.1} parent=15 // pred_check_branch
        %272 = sbr.rel (%p270) target = $region36
      $region35: #{deepseek_moe_forward.1} parent=15 // pred_region
        %p273 = scmp.lt.s32.totalorder %s30, 11
        %s274 = scalar_select %p273, %s30, 11
        %s275 = smul.addr %s274, 8
        %s276 = scalar_lea.vmem %s6, %s275
      $region36: #{deepseek_moe_forward.1} parent=15 // pred_fallthru
        _
    $region16: #{deepseek_moe_forward.1} parent=5 // pred_fallthru
      _
    %p277 = scmp.le.s32.totalorder 1, %s23
    %p278 = scmp.lt.s32.totalorder %s23, 13
    %p279 = pnand %p277, %p278
    %p280 = pneg %p279
    // Predicated region
    $region37: #{deepseek_moe_forward.1} parent=5 // pred_check
      _
    $region38: #{deepseek_moe_forward.1} parent=5 // pred_check_branch
      %282 = sbr.rel (%p279) target = $region40
    $region39: #{deepseek_moe_forward.1} parent=5 // pred_region
      %s283 = ssub.s32 %s23, 1
      %p284 = scmp.lt.s32.totalorder %s32, 11
      %s285 = scalar_select %p284, %s32, 11
      %s286 = smul.addr %s285, 8
      %s287 = scalar_lea.vmem %s2, %s286
      %p288 = pneg %p61
      %p289 = pneg %p58
      %s290 = sld [smem:[#allocation4 + %s32]]
      %p291 = scmp.lt.s32.totalorder %s290, 7
      %s292 = scalar_select %p291, %s290, 7
      %p293 = scmp.lt.s32.totalorder %s33, 0
      %s294 = scalar_select %p293, %s33, 0
      %s295 = smul.addr %s292, 4
      %s296 = sadd.s32 %s294, %s295
      %s297 = smul.addr %s296, 8
      %s298 = scalar_lea.vmem %s3, %s297
      %p299 = pneg %p91
      %p300 = pneg %p88
      %s301 = sld [smem:[#allocation4 + %s32]]
      %p302 = scmp.lt.s32.totalorder %s301, 7
      %s303 = scalar_select %p302, %s301, 7
      %p304 = scmp.lt.s32.totalorder %s33, 0
      %s305 = scalar_select %p304, %s33, 0
      %s306 = smul.addr %s303, 4
      %s307 = sadd.s32 %s305, %s306
      %s308 = smul.addr %s307, 8
      %s309 = scalar_lea.vmem %s4, %s308
      %p310 = pneg %p121
      %p311 = pneg %p118
      %s312 = sld [smem:[#allocation4 + %s32]]
      %s313 = smul.u32 8, %s33
      %p314 = scmp.lt.s32.totalorder %s312, 7
      %s315 = scalar_select %p314, %s312, 7
      %p316 = scmp.lt.s32.totalorder %s313, 7
      %s317 = scalar_select %p316, %s313, 7
      %s318 = smul.addr %s315, 8
      %s319 = sadd.s32 %s317, %s318
      %s320 = smul.addr %s319, 8
      %s321 = scalar_lea.vmem %s5, %s320
      %p322 = pneg %p151
      %p323 = pneg %p148
      %p324 = scmp.lt.s32.totalorder %s32, 11
      %s325 = scalar_select %p324, %s32, 11
      %s326 = smul.addr %s325, 8
      %s327 = scalar_lea.vmem %s6, %s326
      %p328 = pneg %p177
      %p329 = pneg %p174
      %p330 = pneg %p203
      %p331 = pneg %p200
      %p332 = scmp.lt.s32.totalorder %s32, 11
      %s333 = scalar_select %p332, %s32, 11
      %s334 = smul.addr %s333, 8
      %s335 = scalar_lea.vmem %s7, %s334
      %p336 = scmp.lt.s32.totalorder %s32, 11
      %s337 = scalar_select %p336, %s32, 11
      %s338 = smul.addr %s337, 8
      %s339 = scalar_lea.vmem %s2, %s338
      %s340 = sld [smem:[#allocation4 + %s32]]
      %p341 = scmp.lt.s32.totalorder %s340, 7
      %s342 = scalar_select %p341, %s340, 7
      %p343 = scmp.lt.s32.totalorder %s33, 0
      %s344 = scalar_select %p343, %s33, 0
      %s345 = smul.addr %s342, 4
      %s346 = sadd.s32 %s344, %s345
      %s347 = smul.addr %s346, 8
      %s348 = scalar_lea.vmem %s3, %s347
      %s349 = sld [smem:[#allocation4 + %s32]]
      %s350 = sld [smem:[#allocation4 + %s32]]
      %p351 = scmp.lt.s32.totalorder %s350, 7
      %s352 = scalar_select %p351, %s350, 7
      %p353 = scmp.lt.s32.totalorder %s33, 0
      %s354 = scalar_select %p353, %s33, 0
      %s355 = smul.addr %s352, 4
      %s356 = sadd.s32 %s354, %s355
      %s357 = smul.addr %s356, 8
      %s358 = scalar_lea.vmem %s4, %s357
      %s359 = sld [smem:[#allocation4 + %s32]]
      %s360 = sld [smem:[#allocation4 + %s32]]
      %s361 = smul.u32 8, %s33
      %p362 = scmp.lt.s32.totalorder %s360, 7
      %s363 = scalar_select %p362, %s360, 7
      %p364 = scmp.lt.s32.totalorder %s361, 7
      %s365 = scalar_select %p364, %s361, 7
      %s366 = smul.addr %s363, 8
      %s367 = sadd.s32 %s365, %s366
      %s368 = smul.addr %s367, 8
      %s369 = scalar_lea.vmem %s5, %s368
      %s370 = sld [smem:[#allocation4 + %s32]]
      %s371 = smul.u32 8, %s33
      %p372 = scmp.lt.s32.totalorder %s32, 11
      %s373 = scalar_select %p372, %s32, 11
      %s374 = smul.addr %s373, 8
      %s375 = scalar_lea.vmem %s6, %s374
      %p376 = scmp.lt.s32.totalorder %s32, 11
      %s377 = scalar_select %p376, %s32, 11
      %s378 = smul.addr %s377, 8
      %s379 = scalar_lea.vmem %s7, %s378
      %p380 = scmp.eq.s32.totalorder %s33, 0
      // Predicated region
      $region41: #{deepseek_moe_forward.1} parent=39 // pred_check
        %p381 = pneg %p380
      $region42: #{deepseek_moe_forward.1} parent=39 // pred_check_branch
        %383 = sbr.rel (%p381) target = $region44
      $region43: #{deepseek_moe_forward.1} parent=39 // pred_region
        %vm384 = vcmask 261120
        %385 = vst.msk [vmem:[#allocation2] sm:$0xff] %vm384, 0.0
      $region44: #{deepseek_moe_forward.1} parent=39 // pred_fallthru
        _
      %s386 = sld [smem:[#allocation5 + %s32]]
      %p387 = scmp.ne.s32.totalorder %s386, 0
      // Predicated region
      $region45: #{deepseek_moe_forward.1} parent=39 // pred_check
        %p388 = pneg %p387
      $region46: #{deepseek_moe_forward.1} parent=39 // pred_check_branch
        %390 = sbr.rel (%p388) target = $region48
      $region47: #{deepseek_moe_forward.1} parent=39 // pred_region
        %v391 = vld [vmem:[%s339] sm:$0xff]
        %v392 = vld [vmem:[%s348] sm:$0xff]
        %v393 = vld [vmem:[%s348 + $0x8] sm:$0xff]
        %v394 = vld [vmem:[%s348 + $0x10] sm:$0xff]
        %v395 = vld [vmem:[%s348 + $0x18] sm:$0xff]
        %vm396 = vcmask 261120
        %v398 = vsel %vm396, %v391, 0
        %400 = vmatprep.subr.mxu0 0.0
        %401 = vmatpush1.msra.mxu0 %v392
        %402 = vmatprep.subr.mxu0 0.0
        %403 = vmatpush1.msra.mxu0 %v393
        %404 = vmatprep.subr.mxu0 0.0
        %405 = vmatpush1.msra.mxu0 %v394
        %406 = vmatprep.subr.mxu0 0.0
        %407 = vmatpush1.msra.mxu0 %v395
        %408 = vmatprep.subr.mxu0 0.0
        %409 = vmatpush1.msra.mxu0 0.0
        %410 = vmatprep.subr.mxu0 0.0
        %411 = vmatpush1.msra.mxu0 0.0
        %412 = vmatprep.subr.mxu0 0.0
        %413 = vmatpush1.msra.mxu0 0.0
        %414 = vmatprep.subr.mxu0 0.0
        %415 = vmatpush1.msra.mxu0 0.0
        %416 = vmatprep.subr.mxu0 0.0
        %417 = vmatpush1.msra.mxu0 0.0
        %418 = vmatprep.subr.mxu0 0.0
        %419 = vmatpush1.msra.mxu0 0.0
        %420 = vmatprep.subr.mxu0 0.0
        %421 = vmatpush1.msra.mxu0 0.0
        %422 = vmatprep.subr.mxu0 0.0
        %423 = vmatpush1.msra.mxu0 0.0
        %424 = vmatprep.subr.mxu0 0.0
        %425 = vmatpush1.msra.mxu0 0.0
        %426 = vmatprep.subr.mxu0 0.0
        %427 = vmatpush1.msra.mxu0 0.0
        %428 = vmatprep.subr.mxu0 0.0
        %429 = vmatpush1.msra.mxu0 0.0
        %430 = vmatprep.subr.mxu0 0.0
        %431 = vmatpush1.msra.mxu0 0.0
        %432 = vmatprep.subr.mxu0 0.0
        %433 = vmatpush1.msra.mxu0 0.0
        %434 = vmatprep.subr.mxu0 0.0
        %435 = vmatpush1.msra.mxu0 0.0
        %436 = vmatprep.subr.mxu0 0.0
        %437 = vmatpush1.msra.mxu0 0.0
        %438 = vmatprep.subr.mxu0 0.0
        %439 = vmatpush1.msra.mxu0 0.0
        %440 = vmatprep.subr.mxu0 0.0
        %441 = vmatpush1.msra.mxu0 0.0
        %442 = vmatprep.subr.mxu0 0.0
        %443 = vmatpush1.msra.mxu0 0.0
        %444 = vmatprep.subr.mxu0 0.0
        %445 = vmatpush1.msra.mxu0 0.0
        %446 = vmatprep.subr.mxu0 0.0
        %447 = vmatpush1.msra.mxu0 0.0
        %448 = vmatprep.subr.mxu0 0.0
        %449 = vmatpush1.msra.mxu0 0.0
        %450 = vmatprep.subr.mxu0 0.0
        %451 = vmatpush1.msra.mxu0 0.0
        %452 = vmatprep.subr.mxu0 0.0
        %453 = vmatpush1.msra.mxu0 0.0
        %454 = vmatprep.subr.mxu0 0.0
        %455 = vmatpush1.msra.mxu0 0.0
        %456 = vmatprep.subr.mxu0 0.0
        %457 = vmatpush1.msra.mxu0 0.0
        %458 = vmatprep.subr.mxu0 0.0
        %459 = vmatpush1.msra.mxu0 0.0
        %460 = vmatprep.subr.mxu0 0.0
        %461 = vmatpush1.msra.mxu0 0.0
        %462 = vmatprep.subr.mxu0 0.0
        %463 = vmatpush1.msra.mxu0 0.0
        %464 = vmatprep.mubr.f32.mxu0 0.0
        %465 = vmatmul.mubr.f32.gmra.mrb[0].mxu0 %v398
        %v466 = vpop.f32.mrb[0].mxu0
        %v467 = vadd.f32 0.0, %v466
        %v468 = vpop.f32.mrb[0].mxu0
        %469 = vdwg.mxu0
        %v470 = vld [vmem:[%s358] sm:$0xff]
        %v471 = vld [vmem:[%s358 + $0x8] sm:$0xff]
        %v472 = vld [vmem:[%s358 + $0x10] sm:$0xff]
        %v473 = vld [vmem:[%s358 + $0x18] sm:$0xff]
        %474 = vmatprep.subr.mxu0 0.0
        %475 = vmatpush1.msra.mxu0 %v470
        %476 = vmatprep.subr.mxu0 0.0
        %477 = vmatpush1.msra.mxu0 %v471
        %478 = vmatprep.subr.mxu0 0.0
        %479 = vmatpush1.msra.mxu0 %v472
        %480 = vmatprep.subr.mxu0 0.0
        %481 = vmatpush1.msra.mxu0 %v473
        %482 = vmatprep.subr.mxu0 0.0
        %483 = vmatpush1.msra.mxu0 0.0
        %484 = vmatprep.subr.mxu0 0.0
        %485 = vmatpush1.msra.mxu0 0.0
        %486 = vmatprep.subr.mxu0 0.0
        %487 = vmatpush1.msra.mxu0 0.0
        %488 = vmatprep.subr.mxu0 0.0
        %489 = vmatpush1.msra.mxu0 0.0
        %490 = vmatprep.subr.mxu0 0.0
        %491 = vmatpush1.msra.mxu0 0.0
        %492 = vmatprep.subr.mxu0 0.0
        %493 = vmatpush1.msra.mxu0 0.0
        %494 = vmatprep.subr.mxu0 0.0
        %495 = vmatpush1.msra.mxu0 0.0
        %496 = vmatprep.subr.mxu0 0.0
        %497 = vmatpush1.msra.mxu0 0.0
        %498 = vmatprep.subr.mxu0 0.0
        %499 = vmatpush1.msra.mxu0 0.0
        %500 = vmatprep.subr.mxu0 0.0
        %501 = vmatpush1.msra.mxu0 0.0
        %502 = vmatprep.subr.mxu0 0.0
        %503 = vmatpush1.msra.mxu0 0.0
        %504 = vmatprep.subr.mxu0 0.0
        %505 = vmatpush1.msra.mxu0 0.0
        %506 = vmatprep.subr.mxu0 0.0
        %507 = vmatpush1.msra.mxu0 0.0
        %508 = vmatprep.subr.mxu0 0.0
        %509 = vmatpush1.msra.mxu0 0.0
        %510 = vmatprep.subr.mxu0 0.0
        %511 = vmatpush1.msra.mxu0 0.0
        %512 = vmatprep.subr.mxu0 0.0
        %513 = vmatpush1.msra.mxu0 0.0
        %514 = vmatprep.subr.mxu0 0.0
        %515 = vmatpush1.msra.mxu0 0.0
        %516 = vmatprep.subr.mxu0 0.0
        %517 = vmatpush1.msra.mxu0 0.0
        %518 = vmatprep.subr.mxu0 0.0
        %519 = vmatpush1.msra.mxu0 0.0
        %520 = vmatprep.subr.mxu0 0.0
        %521 = vmatpush1.msra.mxu0 0.0
        %522 = vmatprep.subr.mxu0 0.0
        %523 = vmatpush1.msra.mxu0 0.0
        %524 = vmatprep.subr.mxu0 0.0
        %525 = vmatpush1.msra.mxu0 0.0
        %526 = vmatprep.subr.mxu0 0.0
        %527 = vmatpush1.msra.mxu0 0.0
        %528 = vmatprep.subr.mxu0 0.0
        %529 = vmatpush1.msra.mxu0 0.0
        %530 = vmatprep.subr.mxu0 0.0
        %531 = vmatpush1.msra.mxu0 0.0
        %532 = vmatprep.subr.mxu0 0.0
        %533 = vmatpush1.msra.mxu0 0.0
        %534 = vmatprep.subr.mxu0 0.0
        %535 = vmatpush1.msra.mxu0 0.0
        %536 = vmatprep.subr.mxu0 0.0
        %537 = vmatpush1.msra.mxu0 0.0
        %538 = vmatprep.mubr.f32.mxu0 0.0
        %539 = vmatmul.mubr.f32.gmra.mrb[0].mxu0 %v398
        %v540 = vpop.f32.mrb[0].mxu0
        %v541 = vadd.f32 0.0, %v540
        %v542 = vpop.f32.mrb[0].mxu0
        %543 = vdwg.mxu0
        %v544 = vxor.u32 %v467, 2147483648
        %v545 = vmul.f32 %v544, 1.442695
        %v546 = vpow.pop %v545
        %v547 = vadd.f32 %v546, 1.0
        %v548 = vrcp.pop %v547
        %v549 = vmul.f32 1.0, %v548
        %v550 = vmul.f32 %v467, %v549
        %v551 = vmul.f32 %v550, %v541
        %v552 = vld [vmem:[%s375] sm:$0xff]
        %554 = vset.pattern.permute.xlu0 0
        %555 = vperm.xlu0 %554, %v552
        %v556 = vpop.permute.xlu0 %555
        %v558 = vmul.f32 %v556, %v551
        %v559 = vld [vmem:[#allocation2] sm:$0xff]
        %v560 = vld [vmem:[%s369] sm:$0xff]
        %v561 = vld [vmem:[%s369 + $0x8] sm:$0xff]
        %v562 = vld [vmem:[%s369 + $0x10] sm:$0xff]
        %v563 = vld [vmem:[%s369 + $0x18] sm:$0xff]
        %v564 = vld [vmem:[%s369 + $0x20] sm:$0xff]
        %v565 = vld [vmem:[%s369 + $0x28] sm:$0xff]
        %v566 = vld [vmem:[%s369 + $0x30] sm:$0xff]
        %v567 = vld [vmem:[%s369 + $0x38] sm:$0xff]
        %vm568 = vcmask 523264
        %v570 = vsel %vm568, %v558, 0
        %572 = vmatprep.subr.mxu0 0.0
        %573 = vmatpush1.msra.mxu0 %v560
        %574 = vmatprep.subr.mxu0 0.0
        %575 = vmatpush1.msra.mxu0 %v561
        %576 = vmatprep.subr.mxu0 0.0
        %577 = vmatpush1.msra.mxu0 %v562
        %578 = vmatprep.subr.mxu0 0.0
        %579 = vmatpush1.msra.mxu0 %v563
        %580 = vmatprep.subr.mxu0 0.0
        %581 = vmatpush1.msra.mxu0 %v564
        %582 = vmatprep.subr.mxu0 0.0
        %583 = vmatpush1.msra.mxu0 %v565
        %584 = vmatprep.subr.mxu0 0.0
        %585 = vmatpush1.msra.mxu0 %v566
        %586 = vmatprep.subr.mxu0 0.0
        %587 = vmatpush1.msra.mxu0 %v567
        %588 = vmatprep.subr.mxu0 0.0
        %589 = vmatpush1.msra.mxu0 0.0
        %590 = vmatprep.subr.mxu0 0.0
        %591 = vmatpush1.msra.mxu0 0.0
        %592 = vmatprep.subr.mxu0 0.0
        %593 = vmatpush1.msra.mxu0 0.0
        %594 = vmatprep.subr.mxu0 0.0
        %595 = vmatpush1.msra.mxu0 0.0
        %596 = vmatprep.subr.mxu0 0.0
        %597 = vmatpush1.msra.mxu0 0.0
        %598 = vmatprep.subr.mxu0 0.0
        %599 = vmatpush1.msra.mxu0 0.0
        %600 = vmatprep.subr.mxu0 0.0
        %601 = vmatpush1.msra.mxu0 0.0
        %602 = vmatprep.subr.mxu0 0.0
        %603 = vmatpush1.msra.mxu0 0.0
        %604 = vmatprep.subr.mxu0 0.0
        %605 = vmatpush1.msra.mxu0 0.0
        %606 = vmatprep.subr.mxu0 0.0
        %607 = vmatpush1.msra.mxu0 0.0
        %608 = vmatprep.subr.mxu0 0.0
        %609 = vmatpush1.msra.mxu0 0.0
        %610 = vmatprep.subr.mxu0 0.0
        %611 = vmatpush1.msra.mxu0 0.0
        %612 = vmatprep.subr.mxu0 0.0
        %613 = vmatpush1.msra.mxu0 0.0
        %614 = vmatprep.subr.mxu0 0.0
        %615 = vmatpush1.msra.mxu0 0.0
        %616 = vmatprep.subr.mxu0 0.0
        %617 = vmatpush1.msra.mxu0 0.0
        %618 = vmatprep.subr.mxu0 0.0
        %619 = vmatpush1.msra.mxu0 0.0
        %620 = vmatprep.subr.mxu0 0.0
        %621 = vmatpush1.msra.mxu0 0.0
        %622 = vmatprep.subr.mxu0 0.0
        %623 = vmatpush1.msra.mxu0 0.0
        %624 = vmatprep.subr.mxu0 0.0
        %625 = vmatpush1.msra.mxu0 0.0
        %626 = vmatprep.subr.mxu0 0.0
        %627 = vmatpush1.msra.mxu0 0.0
        %628 = vmatprep.subr.mxu0 0.0
        %629 = vmatpush1.msra.mxu0 0.0
        %630 = vmatprep.subr.mxu0 0.0
        %631 = vmatpush1.msra.mxu0 0.0
        %632 = vmatprep.subr.mxu0 0.0
        %633 = vmatpush1.msra.mxu0 0.0
        %634 = vmatprep.subr.mxu0 0.0
        %635 = vmatpush1.msra.mxu0 0.0
        %636 = vmatprep.mubr.f32.mxu0 0.0
        %637 = vmatmul.mubr.f32.gmra.mrb[0].mxu0 %v570
        %v638 = vpop.f32.mrb[0].mxu0
        %v639 = vadd.f32 0.0, %v638
        %v640 = vpop.f32.mrb[0].mxu0
        %641 = vdwg.mxu0
        %v642 = vadd.f32 %v559, %v639
        %643 = vst.msk [vmem:[#allocation2] sm:$0xff] %vm396, %v642
      $region48: #{deepseek_moe_forward.1} parent=39 // pred_fallthru
        _
      // Predicated region
      $region49: #{deepseek_moe_forward.1} parent=39 // pred_check
        %p644 = pneg %p380
      $region50: #{deepseek_moe_forward.1} parent=39 // pred_check_branch
        %646 = sbr.rel (%p644) target = $region52
      $region51: #{deepseek_moe_forward.1} parent=39 // pred_region
        %v647 = vld [vmem:[#allocation2] sm:$0xff]
        %vm648 = vcmask 261120
        %649 = vst.msk [vmem:[%s379] sm:$0xff] %vm648, %v647
      $region52: #{deepseek_moe_forward.1} parent=39 // pred_fallthru
        _
      %p650 = scmp.lt.s32.totalorder %s32, 11
      %s651 = scalar_select %p650, %s32, 11
      %s652 = smul.addr %s651, 8
      %s653 = scalar_lea.vmem %s7, %s652
      // Predicated region
      $region53: #{deepseek_moe_forward.1} parent=39 // pred_check
        %p654 = pneg %p200
      $region54: #{deepseek_moe_forward.1} parent=39 // pred_check_branch
        %656 = sbr.rel (%p654) target = $region56
      $region55: #{deepseek_moe_forward.1} parent=39 // pred_region
        _
      $region56: #{deepseek_moe_forward.1} parent=39 // pred_fallthru
        _
    $region40: #{deepseek_moe_forward.1} parent=5 // pred_fallthru
      _
    %p657 = scmp.le.s32.totalorder 2, %s23
    // Predicated region
    $region57: #{deepseek_moe_forward.1} parent=5 // pred_check
      %p658 = pneg %p657
    $region58: #{deepseek_moe_forward.1} parent=5 // pred_check_branch
      %660 = sbr.rel (%p658) target = $region60
    $region59: #{deepseek_moe_forward.1} parent=5 // pred_region
      %s661 = ssub.s32 %s23, 2
      // Predicated region
      $region61: #{deepseek_moe_forward.1} parent=59 // pred_check
        %p662 = pneg %p206
      $region62: #{deepseek_moe_forward.1} parent=59 // pred_check_branch
        %664 = sbr.rel (%p662) target = $region64
      $region63: #{deepseek_moe_forward.1} parent=59 // pred_region
        %p665 = scmp.lt.s32.totalorder %s34, 11
        %s666 = scalar_select %p665, %s34, 11
        %s667 = smul.addr %s666, 8
        %s668 = scalar_lea.vmem %s7, %s667
      $region64: #{deepseek_moe_forward.1} parent=59 // pred_fallthru
        _
    $region60: #{deepseek_moe_forward.1} parent=5 // pred_fallthru
      _
  $region6: #{deepseek_moe_forward.1} parent=0 // loop_footer
    %s27 = sadd.s32 1, %s23
  $region7: #{deepseek_moe_forward.1} parent=0 // loop_footer_branch
    %22 = sbr.rel target = $region3
  $region8: #{deepseek_moe_forward.1} parent=0 // loop_exit
    _

</llo_original>
